<compile_context>
chip_gen: v5e
topology: v5e:2x2
jax: 0.10.0
libtpu: 0.0.40
codegen_flags: <defaults>
</compile_context>

<pallas_src>
import functools

import jax
import jax.numpy as jnp
from jax import lax
from jax.experimental import pallas as pl
from jax.experimental.pallas import tpu as pltpu


def _pooling_kernel(x_ref, col_ref, inv_ref, o_ref, *, W, pool_size):
    """x_ref:   (Bb, Cc, L) block of the NCHW input flattened over (H, W).
    col_ref: (1, 1, L) int32  column index (n mod W) per flat position.
    inv_ref: (1, 1, L) float32 reciprocal of the valid-window element count.
    o_ref:   (Bb, Cc, L) output block = avg_pool(x) - x."""
    p = pool_size // 2
    Bb, Cc, L = x_ref.shape

    x = x_ref[...]                          # input dtype, lives in VMEM
    xf = x.astype(jnp.float32)

    # ---- vertical (row-direction) box sum: lane shifts by +-dh*W ----------
    # Zero-extending the flat axis by p*W on each side makes out-of-image rows
    # contribute exactly zero; column indices are untouched by W-multiples.
    acc = xf
    if p > 0:
        zv = jnp.zeros((Bb, Cc, p * W), dtype=x.dtype)
        xv = jnp.concatenate([zv, x, zv], axis=-1)          # (Bb, Cc, L + 2pW)
        for dh in range(1, p + 1):
            acc = acc + xv[:, :, (p - dh) * W:(p - dh) * W + L].astype(jnp.float32)
            acc = acc + xv[:, :, (p + dh) * W:(p + dh) * W + L].astype(jnp.float32)

    # ---- horizontal (column-direction) box sum: lane shifts by +-dw -------
    # A flat shift by +-dw can leak across row boundaries, so mask with the
    # column index (also kills the zero-padded flat ends).
    s = acc
    if p > 0:
        col = col_ref[...]                                  # (1, 1, L) int32
        zh = jnp.zeros((Bb, Cc, p), dtype=jnp.float32)
        ap = jnp.concatenate([zh, acc, zh], axis=-1)        # (Bb, Cc, L + 2p)
        for dw in range(1, p + 1):
            left = ap[:, :, p - dw:p - dw + L]              # acc[n - dw]
            s = s + jnp.where(col >= dw, left, 0.0)
            right = ap[:, :, p + dw:p + dw + L]             # acc[n + dw]
            s = s + jnp.where(col < W - dw, right, 0.0)

    o_ref[...] = (s * inv_ref[...] - xf).astype(o_ref.dtype)


def _pick_block(B, C, L, itemsize):
    """(Bb, Cc) block dims: ~1 MiB of input per block, Cc a multiple of 8 (or
    full C), and a grid of >= 2 parallel steps when possible (v7x megacore)."""
    target = (1 << 20) // itemsize          # ~1 MiB of input elements per block
    cc_cands = [d for d in range(C, 0, -1) if C % d == 0 and (d == C or d % 8 == 0)]
    Cc = next((d for d in cc_cands if d * L <= target), cc_cands[-1])
    bb_cands = [d for d in range(B, 0, -1) if B % d == 0]
    Bb = next((d for d in bb_cands if d * Cc * L <= target), 1)
    if (B // Bb) * (C // Cc) < 2:           # keep both v7x TensorCores busy
        if Bb > 1:
            Bb = next(d for d in bb_cands if d < Bb)
        else:
            smaller = [d for d in cc_cands if d < Cc]
            if smaller:
                Cc = smaller[0]
    return Bb, Cc


def poolformer_pooling(hidden_states, pool_size=3):
    """hidden_states: (B, C, H, W). Returns avg_pool2d(x, k, stride=1,
    padding=k//2, count_include_pad=False) - x, matching PoolFormerPooling."""
    if pool_size % 2 != 1:
        raise ValueError("pool_size must be odd so the output matches the input shape")
    B, C, H, W = hidden_states.shape
    p = pool_size // 2
    L = H * W
    dtype = hidden_states.dtype
    itemsize = jnp.dtype(dtype).itemsize

    x3 = hidden_states.reshape(B, C, L)     # free: trailing-dim merge

    # Column index and reciprocal valid count (count_include_pad=False),
    # tiny (1, 1, L) operands that stay resident in VMEM.
    ii = jnp.arange(H, dtype=jnp.int32)
    jj = jnp.arange(W, dtype=jnp.int32)
    cnt_h = jnp.minimum(ii + p, H - 1) - jnp.maximum(ii - p, 0) + 1
    cnt_w = jnp.minimum(jj + p, W - 1) - jnp.maximum(jj - p, 0) + 1
    inv_cnt = (1.0 / (cnt_h[:, None] * cnt_w[None, :]).astype(jnp.float32)).reshape(1, 1, L)
    col_idx = jnp.broadcast_to(jj[None, :], (H, W)).reshape(1, 1, L)

    Bb, Cc = _pick_block(B, C, L, itemsize)
    grid = (B // Bb, C // Cc)

    flops = B * C * L * (4 * p + 2)
    bytes_accessed = 2 * B * C * L * itemsize + 2 * L * 4

    # TODO(synk): for pathological shapes (tiny C with very large H*W) a
    # spatial split with a 2*pad halo would be needed to bound the block size.
    out3 = pl.pallas_call(
        functools.partial(_pooling_kernel, W=W, pool_size=pool_size),
        out_shape=jax.ShapeDtypeStruct((B, C, L), dtype),
        grid=grid,
        in_specs=[
            pl.BlockSpec((Bb, Cc, L), lambda b, c: (b, c, 0)),
            pl.BlockSpec((1, 1, L), lambda b, c: (0, 0, 0)),   # resident col idx
            pl.BlockSpec((1, 1, L), lambda b, c: (0, 0, 0)),   # resident 1/count
        ],
        out_specs=pl.BlockSpec((Bb, Cc, L), lambda b, c: (b, c, 0)),
        compiler_params=pltpu.CompilerParams(
            dimension_semantics=("parallel", "parallel"),
            vmem_limit_bytes=48 * 1024 * 1024,
        ),
        cost_estimate=pl.CostEstimate(
            flops=flops, transcendentals=0, bytes_accessed=bytes_accessed),
    )(x3, col_idx, inv_cnt)

    return out3.reshape(B, C, H, W)


def _reference(x, pool_size):
    """Plain-JAX reference of nn.AvgPool2d(k,1,k//2,count_include_pad=False)(x) - x."""
    pad = pool_size // 2
    padding = [(0, 0), (0, 0), (pad, pad), (pad, pad)]
    window = (1, 1, pool_size, pool_size)
    strides = (1, 1, 1, 1)
    s = lax.reduce_window(x, 0.0, lax.add, window, strides, padding)
    cnt = lax.reduce_window(jnp.ones_like(x), 0.0, lax.add, window, strides, padding)
    return s / cnt - x


if __name__ == "__main__":
    # Small shapes consistent with the module: batch=2, channels=4, spatial=16.
    B, C, H, W = 2, 4, 16, 16
    pool_size = 3

    key = jax.random.PRNGKey(0)
    hidden_states = jax.random.normal(key, (B, C, H, W), dtype=jnp.float32)

    out = poolformer_pooling(hidden_states, pool_size)
    out = jax.block_until_ready(out)

    ref = _reference(hidden_states, pool_size)
    assert out.shape == (B, C, H, W)
    assert jnp.allclose(out, ref, atol=1e-5, rtol=1e-5)

    print("KERNEL_OK")
</pallas_src>

<mosaic_0001>
module attributes {stable_mosaic.version = 11 : i64} {
  func.func @_pooling_kernel(%arg0: i32, %arg1: i32, %arg2: memref<1x4x256xf32, #tpu.memory_space<vmem>>, %arg3: memref<1x1x256xi32, #tpu.memory_space<vmem>>, %arg4: memref<1x1x256xf32, #tpu.memory_space<vmem>>, %arg5: memref<1x4x256xf32, #tpu.memory_space<vmem>>) attributes {dimension_semantics = [#tpu.dimension_semantics<parallel>, #tpu.dimension_semantics<parallel>], iteration_bounds = array<i64: 2, 1>, scalar_prefetch = 0 : i64, scratch_operands = 0 : i64, tpu.core_type = #tpu.core_type<tc>, window_params = [{transform_indices = @transform_0, window_bounds = array<i64: 1, 4, 256>}, {pipeline_mode = #tpu.pipeline_mode<synchronous>, transform_indices = @transform_1, window_bounds = array<i64: 1, 1, 256>}, {pipeline_mode = #tpu.pipeline_mode<synchronous>, transform_indices = @transform_2, window_bounds = array<i64: 1, 1, 256>}, {transform_indices = @transform_3, window_bounds = array<i64: 1, 4, 256>}]} {
    %c0 = arith.constant 0 : index
    %c0_0 = arith.constant 0 : index
    %c0_1 = arith.constant 0 : index
    %0 = vector.load %arg2[%c0, %c0_0, %c0_1] : memref<1x4x256xf32, #tpu.memory_space<vmem>>, vector<1x4x256xf32>
    %cst = arith.constant 0.000000e+00 : f32
    %1 = vector.broadcast %cst : f32 to vector<1x4x16xf32>
    %2 = tpu.concatenate %1, %0, %1 in 2 : vector<1x4x16xf32>, vector<1x4x256xf32>, vector<1x4x16xf32> -> vector<1x4x288xf32>
    %3 = vector.extract_strided_slice %2 {offsets = [0, 0, 0], sizes = [1, 4, 256], strides = [1, 1, 1]} : vector<1x4x288xf32> to vector<1x4x256xf32>
    %4 = arith.addf %0, %3 : vector<1x4x256xf32>
    %5 = vector.extract_strided_slice %2 {offsets = [0, 0, 32], sizes = [1, 4, 256], strides = [1, 1, 1]} : vector<1x4x288xf32> to vector<1x4x256xf32>
    %6 = arith.addf %4, %5 : vector<1x4x256xf32>
    %c0_2 = arith.constant 0 : index
    %c0_3 = arith.constant 0 : index
    %c0_4 = arith.constant 0 : index
    %7 = vector.load %arg3[%c0_2, %c0_3, %c0_4] : memref<1x1x256xi32, #tpu.memory_space<vmem>>, vector<1x1x256xi32>
    %cst_5 = arith.constant 0.000000e+00 : f32
    %8 = vector.broadcast %cst_5 : f32 to vector<1x4x1xf32>
    %9 = tpu.concatenate %8, %6, %8 in 2 : vector<1x4x1xf32>, vector<1x4x256xf32>, vector<1x4x1xf32> -> vector<1x4x258xf32>
    %10 = vector.extract_strided_slice %9 {offsets = [0, 0, 0], sizes = [1, 4, 256], strides = [1, 1, 1]} : vector<1x4x258xf32> to vector<1x4x256xf32>
    %c1_i32 = arith.constant 1 : i32
    %11 = vector.broadcast %c1_i32 : i32 to vector<1x1x256xi32>
    %12 = arith.cmpi sge, %7, %11 : vector<1x1x256xi32>
    %cst_6 = arith.constant 0.000000e+00 : f32
    %13 = vector.shape_cast %12 : vector<1x1x256xi1> to vector<1x1x256xi1>
    %14 = vector.broadcast %13 : vector<1x1x256xi1> to vector<1x4x256xi1>
    %15 = vector.broadcast %cst_6 : f32 to vector<1x4x256xf32>
    %16 = arith.select %14, %10, %15 : vector<1x4x256xi1>, vector<1x4x256xf32>
    %17 = arith.addf %6, %16 : vector<1x4x256xf32>
    %18 = vector.extract_strided_slice %9 {offsets = [0, 0, 2], sizes = [1, 4, 256], strides = [1, 1, 1]} : vector<1x4x258xf32> to vector<1x4x256xf32>
    %c15_i32 = arith.constant 15 : i32
    %19 = vector.broadcast %c15_i32 : i32 to vector<1x1x256xi32>
    %20 = arith.cmpi slt, %7, %19 : vector<1x1x256xi32>
    %cst_7 = arith.constant 0.000000e+00 : f32
    %21 = vector.shape_cast %20 : vector<1x1x256xi1> to vector<1x1x256xi1>
    %22 = vector.broadcast %21 : vector<1x1x256xi1> to vector<1x4x256xi1>
    %23 = vector.broadcast %cst_7 : f32 to vector<1x4x256xf32>
    %24 = arith.select %22, %18, %23 : vector<1x4x256xi1>, vector<1x4x256xf32>
    %25 = arith.addf %17, %24 : vector<1x4x256xf32>
    %c0_8 = arith.constant 0 : index
    %c0_9 = arith.constant 0 : index
    %c0_10 = arith.constant 0 : index
    %26 = vector.load %arg4[%c0_8, %c0_9, %c0_10] : memref<1x1x256xf32, #tpu.memory_space<vmem>>, vector<1x1x256xf32>
    %27 = vector.broadcast %26 : vector<1x1x256xf32> to vector<1x4x256xf32>
    %28 = arith.mulf %25, %27 : vector<1x4x256xf32>
    %29 = arith.subf %28, %0 : vector<1x4x256xf32>
    %c0_11 = arith.constant 0 : index
    %c0_12 = arith.constant 0 : index
    %c0_13 = arith.constant 0 : index
    %30 = vector.load %arg5[%c0_11, %c0_12, %c0_13] : memref<1x4x256xf32, #tpu.memory_space<vmem>>, vector<1x4x256xf32>
    tpu.vector_store %arg5[%c0_11, %c0_12, %c0_13], %29 {strides = array<i32>} : memref<1x4x256xf32, #tpu.memory_space<vmem>>, vector<1x4x256xf32>,
    return
  }
  func.func @transform_0(%arg0: i32, %arg1: i32) -> (i32, i32, i32) {
    %c0_i32 = arith.constant 0 : i32
    %c0_i32_0 = arith.constant 0 : i32
    return %arg0, %arg1, %c0_i32 : i32, i32, i32
  }
  func.func @transform_1(%arg0: i32, %arg1: i32) -> (i32, i32, i32) {
    %c0_i32 = arith.constant 0 : i32
    %c0_i32_0 = arith.constant 0 : i32
    %c0_i32_1 = arith.constant 0 : i32
    %c0_i32_2 = arith.constant 0 : i32
    return %c0_i32, %c0_i32_0, %c0_i32_1 : i32, i32, i32
  }
  func.func @transform_2(%arg0: i32, %arg1: i32) -> (i32, i32, i32) {
    %c0_i32 = arith.constant 0 : i32
    %c0_i32_0 = arith.constant 0 : i32
    %c0_i32_1 = arith.constant 0 : i32
    %c0_i32_2 = arith.constant 0 : i32
    return %c0_i32, %c0_i32_0, %c0_i32_1 : i32, i32, i32
  }
  func.func @transform_3(%arg0: i32, %arg1: i32) -> (i32, i32, i32) {
    %c0_i32 = arith.constant 0 : i32
    %c0_i32_0 = arith.constant 0 : i32
    return %arg0, %arg1, %c0_i32 : i32, i32, i32
  }
}

</mosaic_0001>

<llo_original>
// kernel: tpu_custom_call.1
$region0: #{tpu_custom_call.1}
  #allocation0 [shape = 'u32[]', space=smem, size = 0x4, offset = 0x4, fixed_abs, tag = 'smem constant byte address 0x4 - core index']
  #allocation1 [shape = 'u32[72,128]{1,0:T(1,128)}', space=vmem, size = 0x9000, scoped, tag = 'internal scratch']
  %s0 = inlined_call_operand.hbm [shape: f32[2,4,256], index: 0, kind: input, shape index: {}]
  %s1 = inlined_call_operand.hbm [shape: s32[1,1,256], index: 1, kind: input, shape index: {}]
  %s2 = inlined_call_operand.hbm [shape: f32[1,1,256], index: 2, kind: input, shape index: {}]
  %s3 = inlined_call_operand.hbm [shape: f32[2,4,256], index: 3, kind: output, shape index: {}]
  %s4 = sld [smem:[#allocation0]]
  $region57: #{tpu_custom_call.1} parent=0
    _
  %s6 = ssub.s32 1, %s4
  %s7 = scalar_select 0, %s6, %s4
  $region1: #{tpu_custom_call.1} parent=0
    #allocation2 [shape = 'u8[8192]{0}', space=vmem, size = 0x2000, scoped, tag = 'input window, operand 0']
    #allocation3 [shape = 's32[2]{0}', space=sflag, size = 0x8, scoped, tag = 'scoped memory for tpu_custom_call.1']
    #allocation4 [shape = 's32[2]{0}', space=sflag, size = 0x8, scoped, tag = 'scoped memory for tpu_custom_call.1']
    #allocation5 [shape = 'u8[1024]{0}', space=vmem, size = 0x400, scoped, tag = 'input window, operand 1, single buffered']
    #allocation6 [shape = 's32[1]{0}', space=sflag, size = 0x4, scoped, tag = 'scoped memory for tpu_custom_call.1']
    #allocation7 [shape = 'u8[1024]{0}', space=vmem, size = 0x400, scoped, tag = 'input window, operand 2, single buffered']
    #allocation8 [shape = 'u8[8192]{0}', space=vmem, size = 0x2000, scoped, tag = 'output window, operand 0']
    %8 = vsyncpa [#allocation3], 0
    %s9 = scalar_lea.sflag [#allocation3], 1
    %10 = vsyncpa %s9, 0
    %11 = vsyncpa [#allocation6], 0
    %12 = vsyncpa [#allocation4], 0
    %s13 = scalar_lea.sflag [#allocation4], 1
    %14 = vsyncpa %s13, 0
    loop: start=0, step=1, limit=4
    $region2: #{tpu_custom_call.1} parent=1 // loop_pre_header
      _
    $region3: #{tpu_custom_call.1} parent=1 // loop_header
      %s16 = sphi 0, %s20
      %p17 = scmp.ge.s32.totalorder %s16, 4
      %s23 = sphi 0, %s35
      %s24 = sphi 0, %s31
      %s25 = sphi 0, %s23
      %s26 = sphi 0, %s24
      %s27 = sphi 0, %s25
      %s28 = sphi 0, %s26
      %s40 = sphi 0, %s42
      %s43 = sphi 0, %s40
      %s44 = sphi 0, %s43
      %s60 = sphi 0, %s44
      %s64 = sphi 0, %s64
      %s66 = sphi 0, %s64
      %s67 = sphi 0, %s66
      %s81 = sphi 0, %s67
      %s85 = sphi 0, %s85
      %s87 = sphi 0, %s85
      %s88 = sphi 0, %s87
      %s102 = sphi 0, %s88
      %s110 = sphi 0, %s112
      %s113 = sphi 0, %s110
      %s114 = sphi 0, %s113
      %s130 = sphi 0, %s114
    $region4: #{tpu_custom_call.1} parent=1 // loop_header_branch
      %19 = sbr.rel (%p17) target = $region8
    $region5: #{tpu_custom_call.1} parent=1 // loop_body
      %s21 = ssub.s32 %s16, 1
      %s22 = ssub.s32 %s16, 2
      %s29 = sadd.s32 1, %s24
      %p30 = scmp.ge.s32.totalorder %s29, 1
      %s31 = scalar_select %p30, 0, %s29
      %s32 = sadd.s32 1, %s23
      %s33 = scalar_select %p30, %s32, %s23
      %p34 = scmp.ge.s32.totalorder %s33, 2
      %s35 = scalar_select %p34, 0, %s33
      %s36 = ssub.s32 %s23, %s35
      %s37 = ssub.s32 %s24, %s31
      %s38 = sor.u32 %s36, %s37
      %p39 = scmp.eq.s32.totalorder %s38, 0
      %s41 = sadd.s32 %s40, 1
      %s42 = scalar_select %p39, %s40, %s41
      %p45 = pneg %p39
      %p46 = scmp.eq.s32.totalorder %s16, 1
      %p47 = por %p45, %p46
      %p48 = scmp.ne.s32.totalorder %s40, %s43
      %p49 = scmp.eq.s32.totalorder %s16, 0
      %p50 = por %p48, %p49
      %p51 = scmp.ne.s32.totalorder %s40, %s43
      %p52 = scmp.eq.s32.totalorder %s21, 1
      %p53 = por %p51, %p52
      %p54 = scmp.ne.s32.totalorder %s43, %s44
      %p55 = scmp.eq.s32.totalorder %s21, 0
      %p56 = por %p54, %p55
      %p57 = scmp.ne.s32.totalorder %s43, %s44
      %p58 = scmp.eq.s32.totalorder %s22, 1
      %p59 = por %p57, %p58
      %p61 = scmp.ne.s32.totalorder %s44, %s60
      %p62 = scmp.eq.s32.totalorder %s22, 0
      %p63 = por %p61, %p62
      %s65 = sadd.s32 %s64, 1
      %p68 = scmp.eq.s32.totalorder %s16, 1
      %p69 = scmp.ne.s32.totalorder %s64, %s66
      %p70 = scmp.eq.s32.totalorder %s16, 0
      %p71 = por %p69, %p70
      %p72 = scmp.ne.s32.totalorder %s64, %s66
      %p73 = scmp.eq.s32.totalorder %s21, 1
      %p74 = por %p72, %p73
      %p75 = scmp.ne.s32.totalorder %s66, %s67
      %p76 = scmp.eq.s32.totalorder %s21, 0
      %p77 = por %p75, %p76
      %p78 = scmp.ne.s32.totalorder %s66, %s67
      %p79 = scmp.eq.s32.totalorder %s22, 1
      %p80 = por %p78, %p79
      %p82 = scmp.ne.s32.totalorder %s67, %s81
      %p83 = scmp.eq.s32.totalorder %s22, 0
      %p84 = por %p82, %p83
      %s86 = sadd.s32 %s85, 1
      %p89 = scmp.eq.s32.totalorder %s16, 1
      %p90 = scmp.ne.s32.totalorder %s85, %s87
      %p91 = scmp.eq.s32.totalorder %s16, 0
      %p92 = por %p90, %p91
      %p93 = scmp.ne.s32.totalorder %s85, %s87
      %p94 = scmp.eq.s32.totalorder %s21, 1
      %p95 = por %p93, %p94
      %p96 = scmp.ne.s32.totalorder %s87, %s88
      %p97 = scmp.eq.s32.totalorder %s21, 0
      %p98 = por %p96, %p97
      %p99 = scmp.ne.s32.totalorder %s87, %s88
      %p100 = scmp.eq.s32.totalorder %s22, 1
      %p101 = por %p99, %p100
      %p103 = scmp.ne.s32.totalorder %s88, %s102
      %p104 = scmp.eq.s32.totalorder %s22, 0
      %p105 = por %p103, %p104
      %s106 = ssub.s32 %s23, %s35
      %s107 = ssub.s32 %s24, %s31
      %s108 = sor.u32 %s106, %s107
      %p109 = scmp.eq.s32.totalorder %s108, 0
      %s111 = sadd.s32 %s110, 1
      %s112 = scalar_select %p109, %s110, %s111
      %p115 = pneg %p109
      %p116 = scmp.eq.s32.totalorder %s16, 1
      %p117 = por %p115, %p116
      %p118 = scmp.ne.s32.totalorder %s110, %s113
      %p119 = scmp.eq.s32.totalorder %s16, 0
      %p120 = por %p118, %p119
      %p121 = scmp.ne.s32.totalorder %s110, %s113
      %p122 = scmp.eq.s32.totalorder %s21, 1
      %p123 = por %p121, %p122
      %p124 = scmp.ne.s32.totalorder %s113, %s114
      %p125 = scmp.eq.s32.totalorder %s21, 0
      %p126 = por %p124, %p125
      %p127 = scmp.ne.s32.totalorder %s113, %s114
      %p128 = scmp.eq.s32.totalorder %s22, 1
      %p129 = por %p127, %p128
      %p131 = scmp.ne.s32.totalorder %s114, %s130
      %p132 = scmp.eq.s32.totalorder %s22, 0
      %p133 = por %p131, %p132
      %p134 = scmp.le.s32.totalorder 1, %s16
      %p135 = scmp.lt.s32.totalorder %s16, 3
      %p136 = pnand %p134, %p135
      %p137 = pneg %p136
      // Predicated region
      $region9: #{tpu_custom_call.1} parent=5 // pred_check
        _
      $region10: #{tpu_custom_call.1} parent=5 // pred_check_branch
        %139 = sbr.rel (%p136) target = $region12
      $region11: #{tpu_custom_call.1} parent=5 // pred_region
        %s140 = ssub.s32 %s16, 1
        // Predicated region
        $region13: #{tpu_custom_call.1} parent=11 // pred_check
          %p141 = pneg %p77
        $region14: #{tpu_custom_call.1} parent=11 // pred_check_branch
          %143 = sbr.rel (%p141) target = $region16
        $region15: #{tpu_custom_call.1} parent=11 // pred_region
          %145 = vsyncadd [#allocation6], 0
          %s147 = sshll.u32 %s1, 4
          %s148 = int_to_ptr.hbm [resolvable:$true] %s147
          %s149 = sshll.u32 [#allocation5], 4
          %s150 = int_to_ptr.vmem [resolvable:$true] %s149
          %152 = dma.hbm_to_vmem [thread:$0]  %s148, 32, %s150, [#allocation6]
        $region16: #{tpu_custom_call.1} parent=11 // pred_fallthru
          _
        // Predicated region
        $region17: #{tpu_custom_call.1} parent=11 // pred_check
          %p153 = pneg %p98
        $region18: #{tpu_custom_call.1} parent=11 // pred_check_branch
          %155 = sbr.rel (%p153) target = $region20
        $region19: #{tpu_custom_call.1} parent=11 // pred_region
          %157 = vsyncadd [#allocation6], 0
          %s159 = sshll.u32 %s2, 4
          %s160 = int_to_ptr.hbm [resolvable:$true] %s159
          %s161 = sshll.u32 [#allocation7], 4
          %s162 = int_to_ptr.vmem [resolvable:$true] %s161
          %164 = dma.hbm_to_vmem [thread:$0]  %s160, 32, %s162, [#allocation6]
        $region20: #{tpu_custom_call.1} parent=11 // pred_fallthru
          _
      $region12: #{tpu_custom_call.1} parent=5 // pred_fallthru
        _
      %p165 = scmp.lt.s32.totalorder %s16, 2
      // Predicated region
      $region21: #{tpu_custom_call.1} parent=5 // pred_check
        %p166 = pneg %p165
      $region22: #{tpu_custom_call.1} parent=5 // pred_check_branch
        %168 = sbr.rel (%p166) target = $region24
      $region23: #{tpu_custom_call.1} parent=5 // pred_region
        // Predicated region
        $region25: #{tpu_custom_call.1} parent=23 // pred_check
          %p169 = pneg %p50
        $region26: #{tpu_custom_call.1} parent=23 // pred_check_branch
          %171 = sbr.rel (%p169) target = $region28
        $region27: #{tpu_custom_call.1} parent=23 // pred_region
          %s172 = sand.u32 %s40, 1
          %s173 = scalar_lea.sflag [#allocation3], %s172
          %s174 = sand.u32 %s40, 1
          %s175 = smul.addr %s174, 8
          %s176 = scalar_lea.vmem [#allocation2], %s175
          %178 = vsyncadd %s173, 0
          %s179 = smul.addr %s24, 2
          %s180 = smul.addr %s23, 2
          %s181 = sadd.s32 %s179, %s180
          %s182 = smul.addr %s181, 4
          %s183 = scalar_lea.hbm %s0, %s182
          %s185 = sshll.u32 %s183, 4
          %s186 = int_to_ptr.hbm [resolvable:$true] %s185
          %s187 = sshll.u32 %s176, 4
          %s188 = int_to_ptr.vmem [resolvable:$true] %s187
          %190 = dma.hbm_to_vmem [thread:$0]  %s186, 128, %s188, %s173
        $region28: #{tpu_custom_call.1} parent=23 // pred_fallthru
          _
      $region24: #{tpu_custom_call.1} parent=5 // pred_fallthru
        _
      %p191 = scmp.le.s32.totalorder 1, %s16
      %p192 = scmp.lt.s32.totalorder %s16, 3
      %p193 = pnand %p191, %p192
      %p194 = pneg %p193
      // Predicated region
      $region29: #{tpu_custom_call.1} parent=5 // pred_check
        _
      $region30: #{tpu_custom_call.1} parent=5 // pred_check_branch
        %196 = sbr.rel (%p193) target = $region32
      $region31: #{tpu_custom_call.1} parent=5 // pred_region
        %s197 = ssub.s32 %s16, 1
        %s198 = sand.u32 %s43, 1
        %s199 = scalar_lea.sflag [#allocation3], %s198
        %s200 = sand.u32 %s43, 1
        %s201 = smul.addr %s200, 8
        %s202 = scalar_lea.vmem [#allocation2], %s201
        // Predicated region
        $region33: #{tpu_custom_call.1} parent=31 // pred_check
          %p203 = pneg %p56
        $region34: #{tpu_custom_call.1} parent=31 // pred_check_branch
          %205 = sbr.rel (%p203) target = $region36
        $region35: #{tpu_custom_call.1} parent=31 // pred_region
          %207 = dma.done %s199, 128
        $region36: #{tpu_custom_call.1} parent=31 // pred_fallthru
          _
        // Predicated region
        $region37: #{tpu_custom_call.1} parent=31 // pred_check
          %p208 = pneg %p77
        $region38: #{tpu_custom_call.1} parent=31 // pred_check_branch
          %210 = sbr.rel (%p208) target = $region40
        $region39: #{tpu_custom_call.1} parent=31 // pred_region
          %212 = dma.done [#allocation6], 32
        $region40: #{tpu_custom_call.1} parent=31 // pred_fallthru
          _
        // Predicated region
        $region41: #{tpu_custom_call.1} parent=31 // pred_check
          %p213 = pneg %p98
        $region42: #{tpu_custom_call.1} parent=31 // pred_check_branch
          %215 = sbr.rel (%p213) target = $region44
        $region43: #{tpu_custom_call.1} parent=31 // pred_region
          %217 = dma.done [#allocation6], 32
        $region44: #{tpu_custom_call.1} parent=31 // pred_fallthru
          _
        %s218 = sand.u32 %s43, 1
        %s219 = scalar_lea.sflag [#allocation3], %s218
        %s220 = sand.u32 %s43, 1
        %s221 = smul.addr %s220, 8
        %s222 = scalar_lea.vmem [#allocation2], %s221
        %p223 = pneg %p56
        %p224 = pneg %p53
        %p225 = pneg %p77
        %p226 = pneg %p74
        %p227 = pneg %p98
        %p228 = pneg %p95
        %p229 = pneg %p126
        %p230 = pneg %p123
        %s231 = sand.u32 %s113, 1
        %s232 = scalar_lea.sflag [#allocation4], %s231
        %s233 = sand.u32 %s113, 1
        %s234 = smul.addr %s233, 8
        %s235 = scalar_lea.vmem [#allocation8], %s234
        %v236 = vld [vmem:[%s202] sm:$0xff]
        %238 = vst [vmem:[#allocation1] ss:$2 sm:$0xff] %v236
        %v239 = vld.sshfl [vmem:[#allocation1] sm:$0xff pattern:$0x75316420]
        %v240 = vld.sshfl [vmem:[#allocation1 + $0x8] sm:$0xff pattern:$0x75316420]
        %241 = vrot.lane.b32.xlu0 %v239, 16
        %v242 = vpop.permute.xlu0 %241
        %243 = vrot.lane.b32.xlu0 %v240, 16
        %v244 = vpop.permute.xlu0 %243
        %vm245 = vcmask 130048
        %v246 = vsel %vm245, %v242, %v244
        %v249 = vsel %vm245, 0.0, %v242
        %v250 = vsel %vm245, %v244, 0.0
        %v252 = vrot.slane %v246, 4
        %vm253 = vcmask 1043456
        %v254 = vsel %vm253, %v249, %v252
        %v256 = vadd.f32 %v236, %v254
        %258 = vrot.lane.b32.xlu0 %v254, 96
        %v259 = vpop.permute.xlu0 %258
        %260 = vrot.lane.b32.xlu0 %v250, 96
        %v261 = vpop.permute.xlu0 %260
        %v262 = vrot.slane %v259, 4
        %v263 = vrot.slane %v261, 4
        %v264 = vsel %vm253, %v262, %v263
        %vm265 = vcmask 785408
        %v266 = vsel %vm265, %v259, %v264
        %v268 = vadd.f32 %v256, %v266
        %v269 = vld [vmem:[#allocation5] sm:$0x3]
        %271 = vst [vmem:[#allocation1] ss:$2 sm:$0xff] %v268
        %v272 = vld.sshfl [vmem:[#allocation1] sm:$0xff pattern:$0x75316420]
        %v273 = vld.sshfl [vmem:[#allocation1 + $0x8] sm:$0xff pattern:$0x75316420]
        %274 = vrot.lane.b32.xlu0 %v272, 1
        %v275 = vpop.permute.xlu0 %274
        %276 = vrot.lane.b32.xlu0 %v273, 1
        %v277 = vpop.permute.xlu0 %276
        %vm278 = vcmask 7168
        %v279 = vsel %vm278, %v275, %v277
        %v283 = vsel %vm278, 0.0, %v275
        %v284 = vsel %vm278, %v277, 0.0
        %vm285 = vcmp.ge.s32.totalorder %v269, 1
        %v286 = vsel %vm285, 1, 0
        %v287 = vperm.slane %v286, 0
        %v288 = vperm.slane %v286, 1
        %vm289 = vcmp.eq.s32.totalorder %v287, 1
        %vm290 = vcmp.eq.s32.totalorder %v288, 1
        %v291 = vsel %vm289, %v283, 0.0
        %v292 = vsel %vm290, %v279, 0.0
        %v295 = vrot.slane %v292, 4
        %v296 = vsel %vm253, %v291, %v295
        %v298 = vadd.f32 %v268, %v296
        %vm299 = vcmp.lt.s32.totalorder %v269, 15
        %v300 = vsel %vm299, 1, 0
        %v301 = vperm.slane %v300, 0
        %v302 = vperm.slane %v300, 1
        %vm303 = vcmp.eq.s32.totalorder %v301, 1
        %vm304 = vcmp.eq.s32.totalorder %v302, 1
        %307 = vrot.lane.b32.xlu0 %v283, 126
        %v308 = vpop.permute.xlu0 %307
        %309 = vrot.lane.b32.xlu0 %v279, 126
        %v310 = vpop.permute.xlu0 %309
        %311 = vrot.lane.b32.xlu0 %v284, 126
        %v312 = vpop.permute.xlu0 %311
        %vm313 = vcmask 1031168
        %v314 = vsel %vm313, %v308, %v310
        %v315 = vsel %vm313, %v310, %v312
        %v318 = vsel %vm303, %v314, 0.0
        %v319 = vsel %vm304, %v315, 0.0
        %v322 = vrot.slane %v319, 4
        %v323 = vsel %vm253, %v318, %v322
        %v325 = vadd.f32 %v298, %v323
        %v326 = vld [vmem:[#allocation7] sm:$0x3]
        %v328 = vperm.slane %v326, 0
        %v329 = vperm.slane %v326, 1
        %v330 = vrot.slane %v329, 4
        %v331 = vsel %vm253, %v328, %v330
        %v333 = vmul.f32 %v325, %v331
        %v334 = vsub.f32 %v333, %v236
        %335 = vst [vmem:[%s235] sm:$0xff] %v334
        %s336 = sand.u32 %s113, 1
        %s337 = scalar_lea.sflag [#allocation4], %s336
        %s338 = sand.u32 %s113, 1
        %s339 = smul.addr %s338, 8
        %s340 = scalar_lea.vmem [#allocation8], %s339
        // Predicated region
        $region45: #{tpu_custom_call.1} parent=31 // pred_check
          %p341 = pneg %p123
        $region46: #{tpu_custom_call.1} parent=31 // pred_check_branch
          %343 = sbr.rel (%p341) target = $region48
        $region47: #{tpu_custom_call.1} parent=31 // pred_region
          %345 = vsyncadd %s337, 0
          %s346 = smul.addr %s26, 2
          %s347 = smul.addr %s25, 2
          %s348 = sadd.s32 %s346, %s347
          %s349 = smul.addr %s348, 4
          %s350 = scalar_lea.hbm %s3, %s349
          %s352 = sshll.u32 %s340, 4
          %s353 = int_to_ptr.vmem [resolvable:$true] %s352
          %s354 = sshll.u32 %s350, 4
          %s355 = int_to_ptr.hbm [resolvable:$true] %s354
          %357 = dma.vmem_to_hbm [thread:$0]  %s353, 128, %s355, %s337
        $region48: #{tpu_custom_call.1} parent=31 // pred_fallthru
          _
      $region32: #{tpu_custom_call.1} parent=5 // pred_fallthru
        _
      %p358 = scmp.le.s32.totalorder 2, %s16
      // Predicated region
      $region49: #{tpu_custom_call.1} parent=5 // pred_check
        %p359 = pneg %p358
      $region50: #{tpu_custom_call.1} parent=5 // pred_check_branch
        %361 = sbr.rel (%p359) target = $region52
      $region51: #{tpu_custom_call.1} parent=5 // pred_region
        %s362 = ssub.s32 %s16, 2
        // Predicated region
        $region53: #{tpu_custom_call.1} parent=51 // pred_check
          %p363 = pneg %p129
        $region54: #{tpu_custom_call.1} parent=51 // pred_check_branch
          %365 = sbr.rel (%p363) target = $region56
        $region55: #{tpu_custom_call.1} parent=51 // pred_region
          %s366 = sand.u32 %s114, 1
          %s367 = scalar_lea.sflag [#allocation4], %s366
          %s368 = sand.u32 %s114, 1
          %s369 = smul.addr %s368, 8
          %s370 = scalar_lea.vmem [#allocation8], %s369
          %372 = dma.done %s367, 128
        $region56: #{tpu_custom_call.1} parent=51 // pred_fallthru
          _
      $region52: #{tpu_custom_call.1} parent=5 // pred_fallthru
        _
    $region6: #{tpu_custom_call.1} parent=1 // loop_footer
      %s20 = sadd.s32 1, %s16
    $region7: #{tpu_custom_call.1} parent=1 // loop_footer_branch
      %15 = sbr.rel target = $region3
    $region8: #{tpu_custom_call.1} parent=1 // loop_exit
      _
    %373 = vsyncpa [#allocation3], 1
    %s374 = scalar_lea.sflag [#allocation3], 1
    %375 = vsyncpa %s374, 1
    %376 = vsyncpa [#allocation6], 1
    %377 = vsyncpa [#allocation4], 1
    %s378 = scalar_lea.sflag [#allocation4], 1
    %379 = vsyncpa %s378, 1

</llo_original>
